<compile_context>
chip_gen: v5e
topology: v5e:2x2
jax: 0.10.0
libtpu: 0.0.40
codegen_flags: <defaults>
</compile_context>

<pallas_src>
import numpy as np
import jax
import jax.numpy as jnp
from jax.experimental import pallas as pl
from jax.experimental.pallas import tpu as pltpu


# ----------------------------- Pallas kernel -------------------------------

def stock_cnn_kernel(hh1_ref, w1_ref, w2_ref, b2_ref,
                     fc1w_ref, fc1b_ref, fc2w_ref, fc2b_ref, out_ref, m_scr):
    BBT = hh1_ref.shape[0]          # rows in this block = BB * T
    BB = out_ref.shape[0]           # batches in this block
    T = BBT // BB
    Tp = T // 2
    C2 = w2_ref.shape[1]

    # conv1(k=3, pad=1) + bias + relu as ONE matmul: the three shifted taps and
    # the constant-1 bias column were prepared in the wrapper
    # (hh1[b,t] = [x[t-1], x[t], x[t+1], 1]).
    h1 = jnp.maximum(
        jnp.dot(hh1_ref[...], w1_ref[...], preferred_element_type=jnp.float32),
        0.0)                                                        # (BBT, C1)

    # conv2(k=3, pad=1): taps built in-kernel (h1 is produced here) via sublane
    # rolls with NON-NEGATIVE shifts, zero-masked at per-batch time boundaries.
    row = jax.lax.broadcasted_iota(jnp.int32, (BBT, 1), 0)
    tmod = row % T
    h_prev = jnp.where(tmod != 0, pltpu.roll(h1, shift=1, axis=0), 0.0)
    h_next = jnp.where(tmod != (T - 1), pltpu.roll(h1, shift=BBT - 1, axis=0), 0.0)
    hh2 = jnp.concatenate([h_prev, h1, h_next], axis=-1)            # (BBT, 3*C1)
    h2 = jnp.maximum(
        jnp.dot(hh2, w2_ref[...], preferred_element_type=jnp.float32)
        + b2_ref[...], 0.0)                                         # (BBT, C2)

    # max_pool1d(k=2): m[r] = max(h2[r], h2[r+1]).  Only even-t rows are
    # consumed below, so the wraparound of the final row is never read and the
    # trailing odd time step (odd T) is dropped, exactly like PyTorch.
    m = jnp.maximum(h2, pltpu.roll(h2, shift=BBT - 1, axis=0))      # (BBT, C2)

    # Flatten: stash pooled rows in a tiny VMEM scratch and gather the BB*Tp
    # even-t rows into one compact (BB, Tp*C2) slab (feature order t'*C2 + c;
    # the fc1 weight rows were permuted to match in the wrapper).
    m_scr[...] = m
    rows = []
    for b in range(BB):
        pieces = [m_scr[pl.ds(b * T + 2 * tp, 1), :] for tp in range(Tp)]
        rows.append(jnp.concatenate(pieces, axis=-1))               # (1, Tp*C2)
    flat = jnp.concatenate(rows, axis=0)                            # (BB, Tp*C2)

    # fc1 + relu: single compact matmul for all batches in the block.
    f1 = jnp.maximum(
        jnp.dot(flat, fc1w_ref[...], preferred_element_type=jnp.float32)
        + fc1b_ref[...], 0.0)                                       # (BB, H)

    # fc2: weight/bias lane-padded to 128 wrapper-side -> lane-dense store.
    out_ref[...] = (jnp.dot(f1, fc2w_ref[...], preferred_element_type=jnp.float32)
                    + fc2b_ref[...])


# ------------------------------ JAX wrapper --------------------------------

def stock_predictor_cnn(x, w1, b1, w2, b2, fc1_w, fc1_b, fc2_w, fc2_b,
                        *, batch_block=8):
    """x: (B, time_steps, input_channels); weights in PyTorch layouts:
       w1:(C1,Cin,3) b1:(C1,)  w2:(C2,C1,3) b2:(C2,)
       fc1_w:(60, C2*Tp) fc1_b:(60,)  fc2_w:(NC,60) fc2_b:(NC,)"""
    B, T, Cin = x.shape
    C1 = w1.shape[0]
    C2 = w2.shape[0]
    Tp = T // 2
    H = fc1_w.shape[0]
    NC = fc2_w.shape[0]

    # Batch-block the row dimension ("parallel" grid) so the design scales
    # across TensorCores and bounds per-block VMEM; pad B up to a multiple.
    BB = min(B, batch_block)
    nb = -(-B // BB)
    Bp = nb * BB

    xb = x.astype(jnp.float32)
    if Bp != B:
        xb = jnp.pad(xb, ((0, Bp - B), (0, 0), (0, 0)))

    # conv1 taps + bias column hoisted to the wrapper (layout plumbing only):
    # hh1[b*T+t] = [x[t-1], x[t], x[t+1], 1]  (zero padding at t=0 / t=T-1).
    x_prev = jnp.pad(xb, ((0, 0), (1, 0), (0, 0)))[:, :T, :]
    x_next = jnp.pad(xb, ((0, 0), (0, 1), (0, 0)))[:, 1:, :]
    ones = jnp.ones((Bp, T, 1), jnp.float32)
    hh1 = jnp.concatenate([x_prev, xb, x_next, ones],
                          axis=-1).reshape(Bp * T, 3 * Cin + 1)

    # Conv weights -> (3*Cin_layer, Cout); tap-major row blocks [t-1, t, t+1];
    # conv1 bias is folded in as the last weight row (pairs with the 1 column).
    w1k = jnp.transpose(w1, (2, 1, 0)).reshape(3 * Cin, C1).astype(jnp.float32)
    w1k = jnp.concatenate([w1k, b1.reshape(1, C1).astype(jnp.float32)], axis=0)
    w2k = jnp.transpose(w2, (2, 1, 0)).reshape(3 * C1, C2).astype(jnp.float32)
    b2k = b2.reshape(1, C2).astype(jnp.float32)

    # PyTorch flattens pooled (C2, Tp) channel-major (f = c*Tp + t'); kernel
    # feature order is f = t'*C2 + c, so permute the fc1 weight rows.
    fc1w_k = jnp.transpose(fc1_w.reshape(H, C2, Tp), (2, 1, 0)).reshape(Tp * C2, H)
    fc1w_k = fc1w_k.astype(jnp.float32)
    fc1b_k = fc1_b.reshape(1, H).astype(jnp.float32)

    # Lane-dense output: pad fc2 to a multiple of 128 lanes (unmasked vst in the
    # kernel), slice back to NC here.
    NCP = -(-NC // 128) * 128
    fc2w_k = jnp.pad(fc2_w.T.astype(jnp.float32), ((0, 0), (0, NCP - NC)))
    fc2b_k = jnp.pad(fc2_b.astype(jnp.float32), (0, NCP - NC)).reshape(1, NCP)

    # NOTE: on v6e/v7x the matmul operands could be cast to bf16 here (keeping
    # preferred_element_type=f32 and f32 elementwise); kept f32 so the strict
    # f32 reference check below remains valid.

    def fixed(a):
        nd = a.ndim
        return pl.BlockSpec(a.shape, lambda i, nd=nd: (0,) * nd)

    out = pl.pallas_call(
        stock_cnn_kernel,
        out_shape=jax.ShapeDtypeStruct((Bp, NCP), jnp.float32),
        grid=(nb,),
        in_specs=[pl.BlockSpec((BB * T, 3 * Cin + 1), lambda i: (i, 0)),
                  fixed(w1k), fixed(w2k), fixed(b2k),
                  fixed(fc1w_k), fixed(fc1b_k), fixed(fc2w_k), fixed(fc2b_k)],
        out_specs=pl.BlockSpec((BB, NCP), lambda i: (i, 0)),
        scratch_shapes=[pltpu.VMEM((BB * T, C2), jnp.float32)],
        compiler_params=pltpu.CompilerParams(
            dimension_semantics=("parallel",)),
    )(hh1, w1k, w2k, b2k, fc1w_k, fc1b_k, fc2w_k, fc2b_k)
    return out[:B, :NC]


# ------------------------------ pure-JAX ref --------------------------------

def reference(x, w1, b1, w2, b2, fc1_w, fc1_b, fc2_w, fc2_b):
    def conv1d(h, w, b):  # h:(B,Ci,T) w:(Co,Ci,3) b:(Co,)
        T = h.shape[2]
        hp = jnp.pad(h, ((0, 0), (0, 0), (1, 1)))
        y = sum(jnp.einsum('bct,oc->bot', hp[:, :, k:k + T], w[:, :, k])
                for k in range(3))
        return y + b[None, :, None]

    xc = jnp.transpose(x, (0, 2, 1))                    # (B, Cin, T)
    h1 = jax.nn.relu(conv1d(xc, w1, b1))
    h2 = jax.nn.relu(conv1d(h1, w2, b2))
    B, C2, T = h2.shape
    pooled = jnp.max(h2.reshape(B, C2, T // 2, 2), axis=-1)
    flat = pooled.reshape(B, -1)
    f1 = jax.nn.relu(flat @ fc1_w.T + fc1_b)
    return f1 @ fc2_w.T + fc2_b


# --------------------------------- main -------------------------------------

if __name__ == "__main__":
    # Small shapes consistent with the module.
    B, T, Cin = 2, 16, 4            # batch, time_steps, input_channels
    C1 = 8                          # conv1_out_channels
    C2 = C1 // 2                    # conv2 out channels
    NC = 3                          # num_classes
    F1 = T // 2 * C1 // 2           # fc1 input features = 32
    H = 60

    key = jax.random.PRNGKey(0)
    ks = jax.random.split(key, 9)
    x = jax.random.normal(ks[0], (B, T, Cin), dtype=jnp.float32)
    w1 = 0.1 * jax.random.normal(ks[1], (C1, Cin, 3), dtype=jnp.float32)
    b1 = 0.1 * jax.random.normal(ks[2], (C1,), dtype=jnp.float32)
    w2 = 0.1 * jax.random.normal(ks[3], (C2, C1, 3), dtype=jnp.float32)
    b2 = 0.1 * jax.random.normal(ks[4], (C2,), dtype=jnp.float32)
    fc1_w = 0.1 * jax.random.normal(ks[5], (H, F1), dtype=jnp.float32)
    fc1_b = 0.1 * jax.random.normal(ks[6], (H,), dtype=jnp.float32)
    fc2_w = 0.1 * jax.random.normal(ks[7], (NC, H), dtype=jnp.float32)
    fc2_b = 0.1 * jax.random.normal(ks[8], (NC,), dtype=jnp.float32)

    out = stock_predictor_cnn(x, w1, b1, w2, b2, fc1_w, fc1_b, fc2_w, fc2_b)
    out = jax.block_until_ready(out)

    ref = reference(x, w1, b1, w2, b2, fc1_w, fc1_b, fc2_w, fc2_b)
    np.testing.assert_allclose(np.asarray(out), np.asarray(ref),
                               rtol=1e-4, atol=1e-5)
    print("KERNEL_OK")
</pallas_src>

<mosaic_0001>
module attributes {stable_mosaic.version = 11 : i64} {
  func.func @stock_cnn_kernel(%arg0: i32, %arg1: memref<32x13xf32, #tpu.memory_space<vmem>>, %arg2: memref<13x8xf32, #tpu.memory_space<vmem>>, %arg3: memref<24x4xf32, #tpu.memory_space<vmem>>, %arg4: memref<1x4xf32, #tpu.memory_space<vmem>>, %arg5: memref<32x60xf32, #tpu.memory_space<vmem>>, %arg6: memref<1x60xf32, #tpu.memory_space<vmem>>, %arg7: memref<60x128xf32, #tpu.memory_space<vmem>>, %arg8: memref<1x128xf32, #tpu.memory_space<vmem>>, %arg9: memref<2x128xf32, #tpu.memory_space<vmem>>, %arg10: memref<32x4xf32, #tpu.memory_space<vmem>>) attributes {dimension_semantics = [#tpu.dimension_semantics<parallel>], iteration_bounds = array<i64: 1>, scalar_prefetch = 0 : i64, scratch_operands = 1 : i64, tpu.core_type = #tpu.core_type<tc>, window_params = [{transform_indices = @transform_0, window_bounds = array<i64: 32, 13>}, {pipeline_mode = #tpu.pipeline_mode<synchronous>, transform_indices = @transform_1, window_bounds = array<i64: 13, 8>}, {pipeline_mode = #tpu.pipeline_mode<synchronous>, transform_indices = @transform_2, window_bounds = array<i64: 24, 4>}, {pipeline_mode = #tpu.pipeline_mode<synchronous>, transform_indices = @transform_3, window_bounds = array<i64: 1, 4>}, {pipeline_mode = #tpu.pipeline_mode<synchronous>, transform_indices = @transform_4, window_bounds = array<i64: 32, 60>}, {pipeline_mode = #tpu.pipeline_mode<synchronous>, transform_indices = @transform_5, window_bounds = array<i64: 1, 60>}, {pipeline_mode = #tpu.pipeline_mode<synchronous>, transform_indices = @transform_6, window_bounds = array<i64: 60, 128>}, {pipeline_mode = #tpu.pipeline_mode<synchronous>, transform_indices = @transform_7, window_bounds = array<i64: 1, 128>}, {transform_indices = @transform_8, window_bounds = array<i64: 2, 128>}]} {
    %c0 = arith.constant 0 : index
    %c0_0 = arith.constant 0 : index
    %0 = vector.load %arg1[%c0, %c0_0] : memref<32x13xf32, #tpu.memory_space<vmem>>, vector<32x13xf32>
    %c0_1 = arith.constant 0 : index
    %c0_2 = arith.constant 0 : index
    %1 = vector.load %arg2[%c0_1, %c0_2] : memref<13x8xf32, #tpu.memory_space<vmem>>, vector<13x8xf32>
    %cst = arith.constant dense<0.000000e+00> : vector<32x8xf32>
    %2 = tpu.matmul %0, %1, %cst {dimension_numbers = #tpu.dot_dimension_numbers<[1], [0], [0], [1], [0, 0, 1, 1], [], []>} : vector<32x13xf32>, vector<13x8xf32>, vector<32x8xf32> -> vector<32x8xf32>
    %cst_3 = arith.constant 0.000000e+00 : f32
    %3 = vector.broadcast %cst_3 : f32 to vector<32x8xf32>
    %4 = arith.maximumf %2, %3 : vector<32x8xf32>
    %5 = tpu.iota {dimensions = array<i32: 0>} : vector<32x1xi32>
    %c16_i32 = arith.constant 16 : i32
    %c0_i32 = arith.constant 0 : i32
    %6 = arith.cmpi eq, %c16_i32, %c0_i32 : i32
    %c1_i32 = arith.constant 1 : i32
    %7 = arith.select %6, %c1_i32, %c16_i32 : i32
    %8 = vector.broadcast %7 : i32 to vector<32x1xi32>
    %9 = arith.remsi %5, %8 : vector<32x1xi32>
    %c0_i32_4 = arith.constant 0 : i32
    %10 = vector.broadcast %c0_i32_4 : i32 to vector<32x1xi32>
    %11 = arith.cmpi ne, %9, %10 : vector<32x1xi32>
    %c0_i32_5 = arith.constant 0 : i32
    %12 = vector.broadcast %c0_i32_5 : i32 to vector<32x1xi32>
    %13 = arith.cmpi slt, %9, %12 : vector<32x1xi32>
    %c0_i32_6 = arith.constant 0 : i32
    %14 = arith.cmpi slt, %7, %c0_i32_6 : i32
    %15 = vector.broadcast %14 : i1 to vector<32x1xi1>
    %16 = vector.broadcast %15 : vector<32x1xi1> to vector<32x1xi1>
    %17 = arith.xori %13, %16 : vector<32x1xi1>
    %18 = arith.andi %17, %11 : vector<32x1xi1>
    %19 = vector.broadcast %7 : i32 to vector<32x1xi32>
    %20 = arith.addi %9, %19 : vector<32x1xi32>
    %21 = arith.select %18, %20, %9 : vector<32x1xi1>, vector<32x1xi32>
    %c0_i32_7 = arith.constant 0 : i32
    %22 = vector.broadcast %c0_i32_7 : i32 to vector<32x1xi32>
    %23 = arith.cmpi ne, %21, %22 : vector<32x1xi32>
    %c1_i32_8 = arith.constant 1 : i32
    %24 = tpu.dynamic_rotate %4 by %c1_i32_8 dim 0 : vector<32x8xf32>, i32 -> vector<32x8xf32>
    %cst_9 = arith.constant 0.000000e+00 : f32
    %25 = vector.shape_cast %23 : vector<32x1xi1> to vector<32x1xi1>
    %26 = vector.broadcast %25 : vector<32x1xi1> to vector<32x8xi1>
    %27 = vector.broadcast %cst_9 : f32 to vector<32x8xf32>
    %28 = arith.select %26, %24, %27 : vector<32x8xi1>, vector<32x8xf32>
    %c15_i32 = arith.constant 15 : i32
    %29 = vector.broadcast %c15_i32 : i32 to vector<32x1xi32>
    %30 = arith.cmpi ne, %21, %29 : vector<32x1xi32>
    %c31_i32 = arith.constant 31 : i32
    %31 = tpu.dynamic_rotate %4 by %c31_i32 dim 0 : vector<32x8xf32>, i32 -> vector<32x8xf32>
    %cst_10 = arith.constant 0.000000e+00 : f32
    %32 = vector.shape_cast %30 : vector<32x1xi1> to vector<32x1xi1>
    %33 = vector.broadcast %32 : vector<32x1xi1> to vector<32x8xi1>
    %34 = vector.broadcast %cst_10 : f32 to vector<32x8xf32>
    %35 = arith.select %33, %31, %34 : vector<32x8xi1>, vector<32x8xf32>
    %36 = tpu.concatenate %28, %4, %35 in 1 : vector<32x8xf32>, vector<32x8xf32>, vector<32x8xf32> -> vector<32x24xf32>
    %c0_11 = arith.constant 0 : index
    %c0_12 = arith.constant 0 : index
    %37 = vector.load %arg3[%c0_11, %c0_12] : memref<24x4xf32, #tpu.memory_space<vmem>>, vector<24x4xf32>
    %cst_13 = arith.constant dense<0.000000e+00> : vector<32x4xf32>
    %38 = tpu.matmul %36, %37, %cst_13 {dimension_numbers = #tpu.dot_dimension_numbers<[1], [0], [0], [1], [0, 0, 1, 1], [], []>} : vector<32x24xf32>, vector<24x4xf32>, vector<32x4xf32> -> vector<32x4xf32>
    %c0_14 = arith.constant 0 : index
    %c0_15 = arith.constant 0 : index
    %39 = vector.load %arg4[%c0_14, %c0_15] : memref<1x4xf32, #tpu.memory_space<vmem>>, vector<1x4xf32>
    %40 = vector.broadcast %39 : vector<1x4xf32> to vector<32x4xf32>
    %41 = arith.addf %38, %40 : vector<32x4xf32>
    %cst_16 = arith.constant 0.000000e+00 : f32
    %42 = vector.broadcast %cst_16 : f32 to vector<32x4xf32>
    %43 = arith.maximumf %41, %42 : vector<32x4xf32>
    %c31_i32_17 = arith.constant 31 : i32
    %44 = tpu.dynamic_rotate %43 by %c31_i32_17 dim 0 : vector<32x4xf32>, i32 -> vector<32x4xf32>
    %45 = arith.maximumf %43, %44 : vector<32x4xf32>
    %c0_18 = arith.constant 0 : index
    %c0_19 = arith.constant 0 : index
    %46 = vector.load %arg10[%c0_18, %c0_19] : memref<32x4xf32, #tpu.memory_space<vmem>>, vector<32x4xf32>
    tpu.vector_store %arg10[%c0_18, %c0_19], %45 {strides = array<i32>} : memref<32x4xf32, #tpu.memory_space<vmem>>, vector<32x4xf32>,
    %c0_20 = arith.constant 0 : index
    %c0_21 = arith.constant 0 : index
    %47 = vector.load %arg10[%c0_20, %c0_21] : memref<32x4xf32, #tpu.memory_space<vmem>>, vector<1x4xf32>
    %c2 = arith.constant 2 : index
    %c0_22 = arith.constant 0 : index
    %48 = vector.load %arg10[%c2, %c0_22] : memref<32x4xf32, #tpu.memory_space<vmem>>, vector<1x4xf32>
    %c4 = arith.constant 4 : index
    %c0_23 = arith.constant 0 : index
    %49 = vector.load %arg10[%c4, %c0_23] : memref<32x4xf32, #tpu.memory_space<vmem>>, vector<1x4xf32>
    %c6 = arith.constant 6 : index
    %c0_24 = arith.constant 0 : index
    %50 = vector.load %arg10[%c6, %c0_24] : memref<32x4xf32, #tpu.memory_space<vmem>>, vector<1x4xf32>
    %c8 = arith.constant 8 : index
    %c0_25 = arith.constant 0 : index
    %51 = vector.load %arg10[%c8, %c0_25] : memref<32x4xf32, #tpu.memory_space<vmem>>, vector<1x4xf32>
    %c10 = arith.constant 10 : index
    %c0_26 = arith.constant 0 : index
    %52 = vector.load %arg10[%c10, %c0_26] : memref<32x4xf32, #tpu.memory_space<vmem>>, vector<1x4xf32>
    %c12 = arith.constant 12 : index
    %c0_27 = arith.constant 0 : index
    %53 = vector.load %arg10[%c12, %c0_27] : memref<32x4xf32, #tpu.memory_space<vmem>>, vector<1x4xf32>
    %c14 = arith.constant 14 : index
    %c0_28 = arith.constant 0 : index
    %54 = vector.load %arg10[%c14, %c0_28] : memref<32x4xf32, #tpu.memory_space<vmem>>, vector<1x4xf32>
    %55 = tpu.concatenate %47, %48, %49, %50, %51, %52, %53, %54 in 1 : vector<1x4xf32>, vector<1x4xf32>, vector<1x4xf32>, vector<1x4xf32>, vector<1x4xf32>, vector<1x4xf32>, vector<1x4xf32>, vector<1x4xf32> -> vector<1x32xf32>
    %c16 = arith.constant 16 : index
    %c0_29 = arith.constant 0 : index
    %56 = vector.load %arg10[%c16, %c0_29] : memref<32x4xf32, #tpu.memory_space<vmem>>, vector<1x4xf32>
    %c18 = arith.constant 18 : index
    %c0_30 = arith.constant 0 : index
    %57 = vector.load %arg10[%c18, %c0_30] : memref<32x4xf32, #tpu.memory_space<vmem>>, vector<1x4xf32>
    %c20 = arith.constant 20 : index
    %c0_31 = arith.constant 0 : index
    %58 = vector.load %arg10[%c20, %c0_31] : memref<32x4xf32, #tpu.memory_space<vmem>>, vector<1x4xf32>
    %c22 = arith.constant 22 : index
    %c0_32 = arith.constant 0 : index
    %59 = vector.load %arg10[%c22, %c0_32] : memref<32x4xf32, #tpu.memory_space<vmem>>, vector<1x4xf32>
    %c24 = arith.constant 24 : index
    %c0_33 = arith.constant 0 : index
    %60 = vector.load %arg10[%c24, %c0_33] : memref<32x4xf32, #tpu.memory_space<vmem>>, vector<1x4xf32>
    %c26 = arith.constant 26 : index
    %c0_34 = arith.constant 0 : index
    %61 = vector.load %arg10[%c26, %c0_34] : memref<32x4xf32, #tpu.memory_space<vmem>>, vector<1x4xf32>
    %c28 = arith.constant 28 : index
    %c0_35 = arith.constant 0 : index
    %62 = vector.load %arg10[%c28, %c0_35] : memref<32x4xf32, #tpu.memory_space<vmem>>, vector<1x4xf32>
    %c30 = arith.constant 30 : index
    %c0_36 = arith.constant 0 : index
    %63 = vector.load %arg10[%c30, %c0_36] : memref<32x4xf32, #tpu.memory_space<vmem>>, vector<1x4xf32>
    %64 = tpu.concatenate %56, %57, %58, %59, %60, %61, %62, %63 in 1 : vector<1x4xf32>, vector<1x4xf32>, vector<1x4xf32>, vector<1x4xf32>, vector<1x4xf32>, vector<1x4xf32>, vector<1x4xf32>, vector<1x4xf32> -> vector<1x32xf32>
    %65 = tpu.concatenate %55, %64 in 0 : vector<1x32xf32>, vector<1x32xf32> -> vector<2x32xf32>
    %c0_37 = arith.constant 0 : index
    %c0_38 = arith.constant 0 : index
    %66 = vector.load %arg5[%c0_37, %c0_38] : memref<32x60xf32, #tpu.memory_space<vmem>>, vector<32x60xf32>
    %cst_39 = arith.constant dense<0.000000e+00> : vector<2x60xf32>
    %67 = tpu.matmul %65, %66, %cst_39 {dimension_numbers = #tpu.dot_dimension_numbers<[1], [0], [0], [1], [0, 0, 1, 1], [], []>} : vector<2x32xf32>, vector<32x60xf32>, vector<2x60xf32> -> vector<2x60xf32>
    %c0_40 = arith.constant 0 : index
    %c0_41 = arith.constant 0 : index
    %68 = vector.load %arg6[%c0_40, %c0_41] : memref<1x60xf32, #tpu.memory_space<vmem>>, vector<1x60xf32>
    %69 = vector.broadcast %68 : vector<1x60xf32> to vector<2x60xf32>
    %70 = arith.addf %67, %69 : vector<2x60xf32>
    %cst_42 = arith.constant 0.000000e+00 : f32
    %71 = vector.broadcast %cst_42 : f32 to vector<2x60xf32>
    %72 = arith.maximumf %70, %71 : vector<2x60xf32>
    %c0_43 = arith.constant 0 : index
    %c0_44 = arith.constant 0 : index
    %73 = vector.load %arg7[%c0_43, %c0_44] : memref<60x128xf32, #tpu.memory_space<vmem>>, vector<60x128xf32>
    %cst_45 = arith.constant dense<0.000000e+00> : vector<2x128xf32>
    %74 = tpu.matmul %72, %73, %cst_45 {dimension_numbers = #tpu.dot_dimension_numbers<[1], [0], [0], [1], [0, 0, 1, 1], [], []>} : vector<2x60xf32>, vector<60x128xf32>, vector<2x128xf32> -> vector<2x128xf32>
    %c0_46 = arith.constant 0 : index
    %c0_47 = arith.constant 0 : index
    %75 = vector.load %arg8[%c0_46, %c0_47] : memref<1x128xf32, #tpu.memory_space<vmem>>, vector<1x128xf32>
    %76 = vector.broadcast %75 : vector<1x128xf32> to vector<2x128xf32>
    %77 = arith.addf %74, %76 : vector<2x128xf32>
    %c0_48 = arith.constant 0 : index
    %c0_49 = arith.constant 0 : index
    %78 = vector.load %arg9[%c0_48, %c0_49] : memref<2x128xf32, #tpu.memory_space<vmem>>, vector<2x128xf32>
    tpu.vector_store %arg9[%c0_48, %c0_49], %77 {strides = array<i32>} : memref<2x128xf32, #tpu.memory_space<vmem>>, vector<2x128xf32>,
    return
  }
  func.func @transform_0(%arg0: i32) -> (i32, i32) {
    %c0_i32 = arith.constant 0 : i32
    %c0_i32_0 = arith.constant 0 : i32
    return %arg0, %c0_i32 : i32, i32
  }
  func.func @transform_1(%arg0: i32) -> (i32, i32) {
    %c0_i32 = arith.constant 0 : i32
    %c0_i32_0 = arith.constant 0 : i32
    %c0_i32_1 = arith.constant 0 : i32
    return %c0_i32, %c0_i32_0 : i32, i32
  }
  func.func @transform_2(%arg0: i32) -> (i32, i32) {
    %c0_i32 = arith.constant 0 : i32
    %c0_i32_0 = arith.constant 0 : i32
    %c0_i32_1 = arith.constant 0 : i32
    return %c0_i32, %c0_i32_0 : i32, i32
  }
  func.func @transform_3(%arg0: i32) -> (i32, i32) {
    %c0_i32 = arith.constant 0 : i32
    %c0_i32_0 = arith.constant 0 : i32
    %c0_i32_1 = arith.constant 0 : i32
    return %c0_i32, %c0_i32_0 : i32, i32
  }
  func.func @transform_4(%arg0: i32) -> (i32, i32) {
    %c0_i32 = arith.constant 0 : i32
    %c0_i32_0 = arith.constant 0 : i32
    %c0_i32_1 = arith.constant 0 : i32
    return %c0_i32, %c0_i32_0 : i32, i32
  }
  func.func @transform_5(%arg0: i32) -> (i32, i32) {
    %c0_i32 = arith.constant 0 : i32
    %c0_i32_0 = arith.constant 0 : i32
    %c0_i32_1 = arith.constant 0 : i32
    return %c0_i32, %c0_i32_0 : i32, i32
  }
  func.func @transform_6(%arg0: i32) -> (i32, i32) {
    %c0_i32 = arith.constant 0 : i32
    %c0_i32_0 = arith.constant 0 : i32
    %c0_i32_1 = arith.constant 0 : i32
    return %c0_i32, %c0_i32_0 : i32, i32
  }
  func.func @transform_7(%arg0: i32) -> (i32, i32) {
    %c0_i32 = arith.constant 0 : i32
    %c0_i32_0 = arith.constant 0 : i32
    %c0_i32_1 = arith.constant 0 : i32
    return %c0_i32, %c0_i32_0 : i32, i32
  }
  func.func @transform_8(%arg0: i32) -> (i32, i32) {
    %c0_i32 = arith.constant 0 : i32
    %c0_i32_0 = arith.constant 0 : i32
    return %arg0, %c0_i32 : i32, i32
  }
}

</mosaic_0001>

<llo_original>
// kernel: tpu_custom_call.1
$region0: #{tpu_custom_call.1}
  #allocation0 [shape = 'u32[]', space=smem, size = 0x4, offset = 0x4, fixed_abs, tag = 'smem constant byte address 0x4 - core index']
  #allocation1 [shape = 'u32[72,128]{1,0:T(1,128)}', space=vmem, size = 0x9000, scoped, tag = 'internal scratch']
  #allocation2 [shape = 'f32[32,4]{1,0:T(8,128)}', space=vmem, size = 0x4000, scoped, tag = 'scratch operand']
  %s0 = inlined_call_operand.vmem [shape: f32[32,13], index: 0, kind: input, shape index: {}]
  %s1 = inlined_call_operand.vmem [shape: f32[13,8], index: 1, kind: input, shape index: {}]
  %s2 = inlined_call_operand.vmem [shape: f32[24,4], index: 2, kind: input, shape index: {}]
  %s3 = inlined_call_operand.vmem [shape: f32[1,4], index: 3, kind: input, shape index: {}]
  %s4 = inlined_call_operand.vmem [shape: f32[32,60], index: 4, kind: input, shape index: {}]
  %s5 = inlined_call_operand.vmem [shape: f32[1,60], index: 5, kind: input, shape index: {}]
  %s6 = inlined_call_operand.hbm [shape: f32[60,128], index: 6, kind: input, shape index: {}]
  %s7 = inlined_call_operand.vmem [shape: f32[1,128], index: 7, kind: input, shape index: {}]
  %s8 = inlined_call_operand.hbm [shape: f32[2,128], index: 8, kind: output, shape index: {}]
  %s9 = sld [smem:[#allocation0]]
  $region46: #{tpu_custom_call.1} parent=0
    _
  %s11 = ssub.s32 1, %s9
  %s12 = scalar_select 0, %s11, %s9
  $region1: #{tpu_custom_call.1} parent=0
    #allocation3 [shape = 'u8[32768]{0}', space=vmem, size = 0x8000, scoped, tag = 'input window, operand 6, single buffered']
    #allocation4 [shape = 's32[1]{0}', space=sflag, size = 0x4, scoped, tag = 'scoped memory for tpu_custom_call.1']
    #allocation5 [shape = 's32[1]{0}', space=sflag, size = 0x4, scoped, tag = 'scoped memory for tpu_custom_call.1']
    #allocation6 [shape = 'u8[1024]{0}', space=vmem, size = 0x400, scoped, tag = 'output window, operand 0, single buffered']
    %13 = vsyncpa [#allocation4], 0
    %14 = vsyncpa [#allocation5], 0
    // Predicated region
    $region2: #{tpu_custom_call.1} parent=1 // pred_check
      _
    $region3: #{tpu_custom_call.1} parent=1 // pred_check_branch
      %16 = sbr.rel (0) target = $region5
    $region4: #{tpu_custom_call.1} parent=1 // pred_region
      _
    $region5: #{tpu_custom_call.1} parent=1 // pred_fallthru
      _
    // Predicated region
    $region6: #{tpu_custom_call.1} parent=1 // pred_check
      _
    $region7: #{tpu_custom_call.1} parent=1 // pred_check_branch
      %18 = sbr.rel (0) target = $region9
    $region8: #{tpu_custom_call.1} parent=1 // pred_region
      _
    $region9: #{tpu_custom_call.1} parent=1 // pred_fallthru
      _
    // Predicated region
    $region10: #{tpu_custom_call.1} parent=1 // pred_check
      _
    $region11: #{tpu_custom_call.1} parent=1 // pred_check_branch
      %20 = sbr.rel (0) target = $region13
    $region12: #{tpu_custom_call.1} parent=1 // pred_region
      _
    $region13: #{tpu_custom_call.1} parent=1 // pred_fallthru
      _
    // Predicated region
    $region14: #{tpu_custom_call.1} parent=1 // pred_check
      _
    $region15: #{tpu_custom_call.1} parent=1 // pred_check_branch
      %22 = sbr.rel (0) target = $region17
    $region16: #{tpu_custom_call.1} parent=1 // pred_region
      _
    $region17: #{tpu_custom_call.1} parent=1 // pred_fallthru
      _
    // Predicated region
    $region18: #{tpu_custom_call.1} parent=1 // pred_check
      _
    $region19: #{tpu_custom_call.1} parent=1 // pred_check_branch
      %24 = sbr.rel (0) target = $region21
    $region20: #{tpu_custom_call.1} parent=1 // pred_region
      _
    $region21: #{tpu_custom_call.1} parent=1 // pred_fallthru
      _
    // Predicated region
    $region22: #{tpu_custom_call.1} parent=1 // pred_check
      _
    $region23: #{tpu_custom_call.1} parent=1 // pred_check_branch
      %26 = sbr.rel (0) target = $region25
    $region24: #{tpu_custom_call.1} parent=1 // pred_region
      _
    $region25: #{tpu_custom_call.1} parent=1 // pred_fallthru
      _
    // Predicated region
    $region26: #{tpu_custom_call.1} parent=1 // pred_check
      _
    $region27: #{tpu_custom_call.1} parent=1 // pred_check_branch
      %28 = sbr.rel (0) target = $region29
    $region28: #{tpu_custom_call.1} parent=1 // pred_region
      %30 = vsyncadd [#allocation4], 0
      %s31 = sshll.u32 %s6, 4
      %s32 = int_to_ptr.hbm [resolvable:$true] %s31
      %s33 = sshll.u32 [#allocation3], 4
      %s34 = int_to_ptr.vmem [resolvable:$true] %s33
      %39 = dma.hbm_to_vmem [thread:$0]  %s32, 1024, %s34, [#allocation4], 128, 128, 8
    $region29: #{tpu_custom_call.1} parent=1 // pred_fallthru
      _
    // Predicated region
    $region30: #{tpu_custom_call.1} parent=1 // pred_check
      _
    $region31: #{tpu_custom_call.1} parent=1 // pred_check_branch
      %41 = sbr.rel (0) target = $region33
    $region32: #{tpu_custom_call.1} parent=1 // pred_region
      _
    $region33: #{tpu_custom_call.1} parent=1 // pred_fallthru
      _
    // Predicated region
    $region34: #{tpu_custom_call.1} parent=1 // pred_check
      _
    $region35: #{tpu_custom_call.1} parent=1 // pred_check_branch
      %43 = sbr.rel (0) target = $region37
    $region36: #{tpu_custom_call.1} parent=1 // pred_region
      %45 = dma.done [#allocation4], 1024
    $region37: #{tpu_custom_call.1} parent=1 // pred_fallthru
      _
    %v46 = vld [vmem:[%s0] sm:$0xff]
    %v47 = vld [vmem:[%s0 + $0x8] sm:$0xff]
    %v48 = vld [vmem:[%s0 + $0x10] sm:$0xff]
    %v49 = vld [vmem:[%s0 + $0x18] sm:$0xff]
    %v50 = vld [vmem:[%s1] sm:$0xff]
    %v51 = vld [vmem:[%s1 + $0x8] sm:$0x1f]
    %vm52 = vcmask 105472
    %v54 = vsel %vm52, %v46, 0
    %v57 = vsel %vm52, %v47, 0
    %v60 = vsel %vm52, %v48, 0
    %v63 = vsel %vm52, %v49, 0
    %vm65 = vcmask 1044480
    %v67 = vsel %vm65, %v51, 0
    %69 = vmatpush.msra.mxu0 0.0
    %70 = vmatpush.msra.mxu0 0.0
    %71 = vmatpush.msra.mxu0 0.0
    %72 = vmatpush.msra.mxu0 0.0
    %73 = vmatpush.msra.mxu0 0.0
    %74 = vmatpush.msra.mxu0 0.0
    %75 = vmatpush.msra.mxu0 0.0
    %76 = vmatpush.msra.mxu0 0.0
    %77 = vmatpush.msra.mxu0 0.0
    %78 = vmatpush.msra.mxu0 0.0
    %79 = vmatpush.msra.mxu0 0.0
    %80 = vmatpush.msra.mxu0 0.0
    %81 = vmatpush.msra.mxu0 0.0
    %82 = vmatpush.msra.mxu0 0.0
    %83 = vmatpush.msra.mxu0 %v67
    %84 = vmatpush.msra.mxu0 %v50
    %85 = vmatmul.f32.gmra.mxu0 %v54
    %v86 = vpop.f32.mrf.mxu0
    %v87 = vadd.f32 0.0, %v86
    %88 = vmatmul.f32.gmra.mxu0 %v57
    %v89 = vpop.f32.mrf.mxu0
    %v90 = vadd.f32 0.0, %v89
    %91 = vmatmul.f32.gmra.mxu0 %v60
    %v92 = vpop.f32.mrf.mxu0
    %v93 = vadd.f32 0.0, %v92
    %94 = vmatmul.f32.gmra.mxu0 %v63
    %v95 = vpop.f32.mrf.mxu0
    %v96 = vadd.f32 0.0, %v95
    %97 = vdwg.mxu0
    %v98 = vmax.f32 %v87, 0.0
    %v99 = vmax.f32 %v90, 0.0
    %v100 = vmax.f32 %v93, 0.0
    %v101 = vmax.f32 %v96, 0.0
    %v102 = vlaneseq
    %v103 = vshrl.u32 %v102, 7
    %v104 = vadd.s32 %v103, 8
    %v105 = vadd.s32 %v103, 16
    %v106 = vadd.s32 %v103, 24
    %vm107 = vcmp.lt.s32.totalorder %v103, 0
    %v108 = vsub.s32 0, %v103
    %v109 = vsel %vm107, %v108, %v103
    %v110 = vshrl.u32 %v109, 4
    %v111 = vand.u32 %v109, 15
    %v112 = vsub.s32 0, %v111
    %v113 = vsel %vm107, %v112, %v111
    %vm114 = vcmp.lt.s32.totalorder %v104, 0
    %v115 = vsub.s32 0, %v104
    %v116 = vsel %vm114, %v115, %v104
    %v117 = vshrl.u32 %v116, 4
    %v118 = vand.u32 %v116, 15
    %v119 = vsub.s32 0, %v118
    %v120 = vsel %vm114, %v119, %v118
    %vm121 = vcmp.lt.s32.totalorder %v105, 0
    %v122 = vsub.s32 0, %v105
    %v123 = vsel %vm121, %v122, %v105
    %v124 = vshrl.u32 %v123, 4
    %v125 = vand.u32 %v123, 15
    %v126 = vsub.s32 0, %v125
    %v127 = vsel %vm121, %v126, %v125
    %vm128 = vcmp.lt.s32.totalorder %v106, 0
    %v129 = vsub.s32 0, %v106
    %v130 = vsel %vm128, %v129, %v106
    %v131 = vshrl.u32 %v130, 4
    %v132 = vand.u32 %v130, 15
    %v133 = vsub.s32 0, %v132
    %v134 = vsel %vm128, %v133, %v132
    %vm135 = vcmp.ne.s32.totalorder %v113, 0
    %vm136 = vcmp.ne.s32.totalorder %v120, 0
    %vm137 = vcmp.ne.s32.totalorder %v127, 0
    %vm138 = vcmp.ne.s32.totalorder %v134, 0
    %vm139 = vcmp.lt.s32.totalorder %v113, 0
    %vm140 = vcmp.lt.s32.totalorder %v120, 0
    %vm141 = vcmp.lt.s32.totalorder %v127, 0
    %vm142 = vcmp.lt.s32.totalorder %v134, 0
    %vm143 = vmand %vm139, %vm135
    %vm144 = vmand %vm140, %vm136
    %vm145 = vmand %vm141, %vm137
    %vm146 = vmand %vm142, %vm138
    %v147 = vadd.s32 %v113, 16
    %v148 = vadd.s32 %v120, 16
    %v149 = vadd.s32 %v127, 16
    %v150 = vadd.s32 %v134, 16
    %v151 = vsel %vm143, %v147, %v113
    %v152 = vsel %vm144, %v148, %v120
    %v153 = vsel %vm145, %v149, %v127
    %v154 = vsel %vm146, %v150, %v134
    %vm155 = vcmp.ne.s32.totalorder %v151, 0
    %vm156 = vcmp.ne.s32.totalorder %v152, 0
    %vm157 = vcmp.ne.s32.totalorder %v153, 0
    %vm158 = vcmp.ne.s32.totalorder %v154, 0
    %v159 = vrot.slane %v98, 7
    %v160 = vrot.slane %v99, 7
    %v161 = vrot.slane %v100, 7
    %v162 = vrot.slane %v101, 7
    %vm163 = vcmp.lt.s32.totalorder %v103, 1
    %v164 = vsel %vm163, %v161, %v162
    %v165 = vsel %vm163, %v160, %v161
    %v166 = vsel %vm163, %v159, %v160
    %v167 = vsel %vm163, %v162, %v159
    %v168 = vsel %vm155, 1, 0
    %v169 = vsel %vm156, 1, 0
    %v170 = vsel %vm157, 1, 0
    %v171 = vsel %vm158, 1, 0
    %vm172 = vcmp.eq.s32.totalorder %v168, 1
    %vm173 = vcmp.eq.s32.totalorder %v169, 1
    %vm174 = vcmp.eq.s32.totalorder %v170, 1
    %vm175 = vcmp.eq.s32.totalorder %v171, 1
    %v176 = vsel %vm172, %v167, 0.0
    %v177 = vsel %vm173, %v166, 0.0
    %v178 = vsel %vm174, %v165, 0.0
    %v179 = vsel %vm175, %v164, 0.0
    %vm180 = vcmp.ne.s32.totalorder %v151, 15
    %vm181 = vcmp.ne.s32.totalorder %v152, 15
    %vm182 = vcmp.ne.s32.totalorder %v153, 15
    %vm183 = vcmp.ne.s32.totalorder %v154, 15
    %v184 = vrot.slane %v98, 1
    %v185 = vrot.slane %v99, 1
    %v186 = vrot.slane %v100, 1
    %v187 = vrot.slane %v101, 1
    %vm188 = vcmp.lt.s32.totalorder %v103, 7
    %v189 = vsel %vm188, %v186, %v187
    %v190 = vsel %vm188, %v185, %v186
    %v191 = vsel %vm188, %v184, %v185
    %v192 = vsel %vm188, %v187, %v184
    %v193 = vsel %vm180, 1, 0
    %v194 = vsel %vm181, 1, 0
    %v195 = vsel %vm182, 1, 0
    %v196 = vsel %vm183, 1, 0
    %vm197 = vcmp.eq.s32.totalorder %v193, 1
    %vm198 = vcmp.eq.s32.totalorder %v194, 1
    %vm199 = vcmp.eq.s32.totalorder %v195, 1
    %vm200 = vcmp.eq.s32.totalorder %v196, 1
    %v201 = vsel %vm197, %v191, 0.0
    %v202 = vsel %vm198, %v190, 0.0
    %v203 = vsel %vm199, %v189, 0.0
    %v204 = vsel %vm200, %v192, 0.0
    %209 = vrot.lane.b32.xlu0 %v98, 8
    %v210 = vpop.permute.xlu0 %209
    %211 = vrot.lane.b32.xlu0 %v99, 8
    %v212 = vpop.permute.xlu0 %211
    %213 = vrot.lane.b32.xlu0 %v100, 8
    %v214 = vpop.permute.xlu0 %213
    %215 = vrot.lane.b32.xlu0 %v101, 8
    %v216 = vpop.permute.xlu0 %215
    %225 = vrot.lane.b32.xlu0 %v201, 16
    %v226 = vpop.permute.xlu0 %225
    %227 = vrot.lane.b32.xlu0 %v202, 16
    %v228 = vpop.permute.xlu0 %227
    %229 = vrot.lane.b32.xlu0 %v203, 16
    %v230 = vpop.permute.xlu0 %229
    %231 = vrot.lane.b32.xlu0 %v204, 16
    %v232 = vpop.permute.xlu0 %231
    %vm237 = vcmask 64512
    %v238 = vsel %vm237, %v176, %v210
    %v239 = vsel %vm237, %v177, %v212
    %v240 = vsel %vm237, %v178, %v214
    %v241 = vsel %vm237, %v179, %v216
    %vm242 = vcmask 130048
    %v243 = vsel %vm242, %v238, %v226
    %v244 = vsel %vm242, %v239, %v228
    %v245 = vsel %vm242, %v240, %v230
    %v246 = vsel %vm242, %v241, %v232
    %v247 = vld [vmem:[%s2] sm:$0xff]
    %v248 = vld [vmem:[%s2 + $0x8] sm:$0xff]
    %v249 = vld [vmem:[%s2 + $0x10] sm:$0xff]
    %v250 = vld [vmem:[%s3] sm:$0x1]
    %v252 = vperm.slane %v250, 0
    %vm254 = vcmask 195584
    %v256 = vsel %vm254, %v243, 0
    %v259 = vsel %vm254, %v244, 0
    %v262 = vsel %vm254, %v245, 0
    %v265 = vsel %vm254, %v246, 0
    %267 = vmatpush.msra.mxu0 0.0
    %268 = vmatpush.msra.mxu0 0.0
    %269 = vmatpush.msra.mxu0 0.0
    %270 = vmatpush.msra.mxu0 0.0
    %271 = vmatpush.msra.mxu0 0.0
    %272 = vmatpush.msra.mxu0 0.0
    %273 = vmatpush.msra.mxu0 0.0
    %274 = vmatpush.msra.mxu0 0.0
    %275 = vmatpush.msra.mxu0 0.0
    %276 = vmatpush.msra.mxu0 0.0
    %277 = vmatpush.msra.mxu0 0.0
    %278 = vmatpush.msra.mxu0 0.0
    %279 = vmatpush.msra.mxu0 0.0
    %280 = vmatpush.msra.mxu0 %v249
    %281 = vmatpush.msra.mxu0 %v248
    %282 = vmatpush.msra.mxu0 %v247
    %283 = vmatmul.f32.gmra.mxu0 %v256
    %v284 = vpop.f32.mrf.mxu0
    %v285 = vadd.f32 %v252, %v284
    %286 = vmatmul.f32.gmra.mxu0 %v259
    %v287 = vpop.f32.mrf.mxu0
    %v288 = vadd.f32 %v252, %v287
    %289 = vmatmul.f32.gmra.mxu0 %v262
    %v290 = vpop.f32.mrf.mxu0
    %v291 = vadd.f32 %v252, %v290
    %292 = vmatmul.f32.gmra.mxu0 %v265
    %v293 = vpop.f32.mrf.mxu0
    %v294 = vadd.f32 %v252, %v293
    %295 = vdwg.mxu0
    %v296 = vmax.f32 %v285, 0.0
    %v297 = vmax.f32 %v288, 0.0
    %v298 = vmax.f32 %v291, 0.0
    %v299 = vmax.f32 %v294, 0.0
    %v300 = vrot.slane %v296, 1
    %v301 = vrot.slane %v297, 1
    %v302 = vrot.slane %v298, 1
    %v303 = vrot.slane %v299, 1
    %v304 = vsel %vm188, %v302, %v303
    %v305 = vsel %vm188, %v301, %v302
    %v306 = vsel %vm188, %v300, %v301
    %v307 = vsel %vm188, %v303, %v300
    %v308 = vmax.f32 %v296, %v306
    %v309 = vmax.f32 %v297, %v305
    %v310 = vmax.f32 %v298, %v304
    %v311 = vmax.f32 %v299, %v307
    %vm312 = vcmask 31744
    %313 = vst.msk [vmem:[#allocation2] sm:$0xff] %vm312, %v308
    %314 = vst.msk [vmem:[#allocation2 + $0x8] sm:$0xff] %vm312, %v309
    %315 = vst.msk [vmem:[#allocation2 + $0x10] sm:$0xff] %vm312, %v310
    %316 = vst.msk [vmem:[#allocation2 + $0x18] sm:$0xff] %vm312, %v311
    %v317 = vld [vmem:[#allocation2] sm:$0x1]
    %v318 = vld [vmem:[#allocation2 + $0x2] sm:$0x1]
    %v319 = vld [vmem:[#allocation2 + $0x4] sm:$0x1]
    %v320 = vld [vmem:[#allocation2 + $0x6] sm:$0x1]
    %v321 = vld [vmem:[#allocation2 + $0x8] sm:$0x1]
    %v322 = vld [vmem:[#allocation2 + $0xa] sm:$0x1]
    %v323 = vld [vmem:[#allocation2 + $0xc] sm:$0x1]
    %v324 = vld [vmem:[#allocation2 + $0xe] sm:$0x1]
    %326 = vrot.lane.b32.xlu0 %v318, 4
    %v327 = vpop.permute.xlu0 %326
    %330 = vrot.lane.b32.xlu0 %v319, 8
    %v331 = vpop.permute.xlu0 %330
    %334 = vrot.lane.b32.xlu0 %v320, 12
    %v335 = vpop.permute.xlu0 %334
    %338 = vrot.lane.b32.xlu0 %v321, 16
    %v339 = vpop.permute.xlu0 %338
    %342 = vrot.lane.b32.xlu0 %v322, 20
    %v343 = vpop.permute.xlu0 %342
    %346 = vrot.lane.b32.xlu0 %v323, 24
    %v347 = vpop.permute.xlu0 %346
    %350 = vrot.lane.b32.xlu0 %v324, 28
    %v351 = vpop.permute.xlu0 %350
    %v353 = vsel %vm312, %v317, %v327
    %v354 = vsel %vm237, %v353, %v331
    %vm355 = vcmask 97280
    %v356 = vsel %vm355, %v354, %v335
    %v357 = vsel %vm242, %v356, %v339
    %vm358 = vcmask 162816
    %v359 = vsel %vm358, %v357, %v343
    %v360 = vsel %vm254, %v359, %v347
    %vm361 = vcmask 228352
    %v362 = vsel %vm361, %v360, %v351
    %v363 = vld [vmem:[#allocation2 + $0x10] sm:$0x1]
    %v364 = vld [vmem:[#allocation2 + $0x12] sm:$0x1]
    %v365 = vld [vmem:[#allocation2 + $0x14] sm:$0x1]
    %v366 = vld [vmem:[#allocation2 + $0x16] sm:$0x1]
    %v367 = vld [vmem:[#allocation2 + $0x18] sm:$0x1]
    %v368 = vld [vmem:[#allocation2 + $0x1a] sm:$0x1]
    %v369 = vld [vmem:[#allocation2 + $0x1c] sm:$0x1]
    %v370 = vld [vmem:[#allocation2 + $0x1e] sm:$0x1]
    %372 = vrot.lane.b32.xlu0 %v364, 4
    %v373 = vpop.permute.xlu0 %372
    %376 = vrot.lane.b32.xlu0 %v365, 8
    %v377 = vpop.permute.xlu0 %376
    %380 = vrot.lane.b32.xlu0 %v366, 12
    %v381 = vpop.permute.xlu0 %380
    %384 = vrot.lane.b32.xlu0 %v367, 16
    %v385 = vpop.permute.xlu0 %384
    %388 = vrot.lane.b32.xlu0 %v368, 20
    %v389 = vpop.permute.xlu0 %388
    %392 = vrot.lane.b32.xlu0 %v369, 24
    %v393 = vpop.permute.xlu0 %392
    %396 = vrot.lane.b32.xlu0 %v370, 28
    %v397 = vpop.permute.xlu0 %396
    %v399 = vsel %vm312, %v363, %v373
    %v400 = vsel %vm237, %v399, %v377
    %v401 = vsel %vm355, %v400, %v381
    %v402 = vsel %vm242, %v401, %v385
    %v403 = vsel %vm358, %v402, %v389
    %v404 = vsel %vm254, %v403, %v393
    %v405 = vsel %vm361, %v404, %v397
    %v407 = vrot.slane %v405, 7
    %vm409 = vcmask 1040384
    %v410 = vsel %vm409, %v362, %v407
    %v411 = vld [vmem:[%s4] sm:$0xff]
    %v412 = vld [vmem:[%s4 + $0x8] sm:$0xff]
    %v413 = vld [vmem:[%s4 + $0x10] sm:$0xff]
    %v414 = vld [vmem:[%s4 + $0x18] sm:$0xff]
    %v415 = vld [vmem:[%s5] sm:$0x1]
    %v417 = vperm.slane %v415, 0
    %vm419 = vcmask 261120
    %v421 = vsel %vm419, %v410, 0
    %423 = vmatpush.msra.mxu0 0.0
    %424 = vmatpush.msra.mxu0 0.0
    %425 = vmatpush.msra.mxu0 0.0
    %426 = vmatpush.msra.mxu0 0.0
    %427 = vmatpush.msra.mxu0 0.0
    %428 = vmatpush.msra.mxu0 0.0
    %429 = vmatpush.msra.mxu0 0.0
    %430 = vmatpush.msra.mxu0 0.0
    %431 = vmatpush.msra.mxu0 0.0
    %432 = vmatpush.msra.mxu0 0.0
    %433 = vmatpush.msra.mxu0 0.0
    %434 = vmatpush.msra.mxu0 0.0
    %435 = vmatpush.msra.mxu0 %v414
    %436 = vmatpush.msra.mxu0 %v413
    %437 = vmatpush.msra.mxu0 %v412
    %438 = vmatpush.msra.mxu0 %v411
    %439 = vmatmul.f32.gmra.mxu0 %v421
    %v440 = vpop.f32.mrf.mxu0
    %v441 = vadd.f32 %v417, %v440
    %442 = vdwg.mxu0
    %v443 = vmax.f32 %v441, 0.0
    %v444 = vld [vmem:[#allocation3] sm:$0xff]
    %v445 = vld [vmem:[#allocation3 + $0x8] sm:$0xff]
    %v446 = vld [vmem:[#allocation3 + $0x10] sm:$0xff]
    %v447 = vld [vmem:[#allocation3 + $0x18] sm:$0xff]
    %v448 = vld [vmem:[#allocation3 + $0x20] sm:$0xff]
    %v449 = vld [vmem:[#allocation3 + $0x28] sm:$0xff]
    %v450 = vld [vmem:[#allocation3 + $0x30] sm:$0xff]
    %v451 = vld [vmem:[#allocation3 + $0x38] sm:$0xf]
    %v452 = vld [vmem:[%s7] sm:$0x1]
    %v454 = vperm.slane %v452, 0
    %vm456 = vcmask 490496
    %v458 = vsel %vm456, %v443, 0
    %vm460 = vcmask 1043456
    %v462 = vsel %vm460, %v451, 0
    %464 = vmatpush.msra.mxu0 0.0
    %465 = vmatpush.msra.mxu0 0.0
    %466 = vmatpush.msra.mxu0 0.0
    %467 = vmatpush.msra.mxu0 0.0
    %468 = vmatpush.msra.mxu0 0.0
    %469 = vmatpush.msra.mxu0 0.0
    %470 = vmatpush.msra.mxu0 0.0
    %471 = vmatpush.msra.mxu0 0.0
    %472 = vmatpush.msra.mxu0 %v462
    %473 = vmatpush.msra.mxu0 %v450
    %474 = vmatpush.msra.mxu0 %v449
    %475 = vmatpush.msra.mxu0 %v448
    %476 = vmatpush.msra.mxu0 %v447
    %477 = vmatpush.msra.mxu0 %v446
    %478 = vmatpush.msra.mxu0 %v445
    %479 = vmatpush.msra.mxu0 %v444
    %480 = vmatmul.f32.gmra.mxu0 %v458
    %v481 = vpop.f32.mrf.mxu0
    %v482 = vadd.f32 %v454, %v481
    %483 = vdwg.mxu0
    %484 = vst [vmem:[#allocation6] sm:$0x3] %v482
    // Predicated region
    $region38: #{tpu_custom_call.1} parent=1 // pred_check
      _
    $region39: #{tpu_custom_call.1} parent=1 // pred_check_branch
      %486 = sbr.rel (0) target = $region41
    $region40: #{tpu_custom_call.1} parent=1 // pred_region
      %488 = vsyncadd [#allocation5], 0
      %s490 = sshll.u32 [#allocation6], 4
      %s491 = int_to_ptr.vmem [resolvable:$true] %s490
      %s492 = sshll.u32 %s8, 4
      %s493 = int_to_ptr.hbm [resolvable:$true] %s492
      %495 = dma.vmem_to_hbm [thread:$0]  %s491, 32, %s493, [#allocation5]
    $region41: #{tpu_custom_call.1} parent=1 // pred_fallthru
      _
    // Predicated region
    $region42: #{tpu_custom_call.1} parent=1 // pred_check
      _
    $region43: #{tpu_custom_call.1} parent=1 // pred_check_branch
      %497 = sbr.rel (0) target = $region45
    $region44: #{tpu_custom_call.1} parent=1 // pred_region
      %499 = dma.done [#allocation5], 32
    $region45: #{tpu_custom_call.1} parent=1 // pred_fallthru
      _
    %500 = vsyncpa [#allocation4], 1
    %501 = vsyncpa [#allocation5], 1

</llo_original>
